<compile_context>
chip_gen: v7x
topology: tpu7x:2x2x1
jax: 0.10.0
libtpu: 0.0.40
codegen_flags: <defaults>
</compile_context>

<pallas_src>
import functools

import jax
import jax.numpy as jnp
from jax.experimental import pallas as pl
from jax.experimental.pallas import tpu as pltpu

_LANE = 128
_SUB = 32                               # row-block granularity (covers f32/bf16/int8 packing)
_MIB = 1024 * 1024
_FAST_PATH_VMEM_LIMIT = 16 * _MIB       # whole-problem-in-VMEM threshold for the fast path


def _round_up(x, m):
    return ((x + m - 1) // m) * m


def _sublanes(dtype):
    return max(8, 32 // jnp.dtype(dtype).itemsize)


def _vmem_full_array_bytes(shape, dtype):
    """VMEM footprint of a full 2-D array incl. (sublane, 128) tile padding."""
    r, c = shape
    return _round_up(max(r, 1), _sublanes(dtype)) * _round_up(max(c, 1), _LANE) \
        * jnp.dtype(dtype).itemsize


# --------------------------------------------------------------------------- #
# Fast path: whole problem resident in VMEM, single kernel invocation.
# --------------------------------------------------------------------------- #
def _loss_small_kernel(w_ref, qt_ref, qe_ref, out_ref, *, inv_n):
    qt = qt_ref[...].astype(jnp.float32)
    qe = qe_ref[...].astype(jnp.float32)
    w = w_ref[...].astype(jnp.float32)          # (B, 1) or (B, A); broadcasts below
    d = qt - qe
    x = w * d * d                               # (B, A)
    s = jnp.sum(x, axis=1, keepdims=True)       # (B, 1)
    s = jnp.sum(s, axis=0, keepdims=True)       # (1, 1)
    out_ref[...] = jnp.broadcast_to(s * inv_n, out_ref.shape)


# --------------------------------------------------------------------------- #
# Streaming path: lane-dense [rows, 128] blocks, tiny f32 accumulator.
# --------------------------------------------------------------------------- #
def _loss_stream_kernel(w_ref, qt_ref, qe_ref, out_ref, acc_ref, *,
                        inv_n, n_rows, block_rows, needs_mask):
    i = pl.program_id(0)

    @pl.when(i == 0)
    def _():
        acc_ref[...] = jnp.zeros_like(acc_ref)

    qt = qt_ref[...].astype(jnp.float32)        # (block_rows, 128)
    qe = qe_ref[...].astype(jnp.float32)
    w = w_ref[...]                              # f32 per-element weights
    d = qt - qe
    contrib = w * d * d                         # pure-VPU per-step work

    if needs_mask:                              # static: only for ragged last block
        row_ids = i * block_rows + jax.lax.broadcasted_iota(
            jnp.int32, (block_rows, _LANE), 0)
        contrib = jnp.where(row_ids < n_rows, contrib, 0.0)

    # Per-step sublane partial reduce into a small resident accumulator.
    acc_ref[...] += jnp.sum(contrib, axis=0, keepdims=True)      # (1, 128)

    @pl.when(i == pl.num_programs(0) - 1)
    def _():
        s = jnp.sum(acc_ref[...], axis=1, keepdims=True)          # (1, 1) -- XLU, once
        out_ref[...] = jnp.broadcast_to(s * inv_n, out_ref.shape)


# --------------------------------------------------------------------------- #
# Wrapper
# --------------------------------------------------------------------------- #
def weighted_mse_loss(is_weights, q_target, q_eval, *, force_stream=False):
    """Pallas equivalent of Loss.forward. Returns a scalar float32."""
    q_target = jnp.asarray(q_target)
    q_eval = jnp.asarray(q_eval)
    is_weights = jnp.asarray(is_weights)
    B, A = q_target.shape
    assert q_eval.shape == (B, A)
    n = B * A
    inv_n = 1.0 / float(n)

    rows = _round_up(n, _LANE) // _LANE          # lane-dense row count (flat view)

    w2 = is_weights.reshape(B, -1)               # (B, 1) per-batch or (B, A) per-element
    fast_bytes = (_vmem_full_array_bytes((B, A), q_target.dtype)
                  + _vmem_full_array_bytes((B, A), q_eval.dtype)
                  + _vmem_full_array_bytes(w2.shape, w2.dtype))
    use_fast = (fast_bytes <= _FAST_PATH_VMEM_LIMIT and not force_stream) or rows < _SUB

    if use_fast:
        vmem_limit = min(max(fast_bytes + 2 * _MIB, 16 * _MIB), 48 * _MIB)
        out = pl.pallas_call(
            functools.partial(_loss_small_kernel, inv_n=inv_n),
            out_shape=jax.ShapeDtypeStruct((1, _LANE), jnp.float32),
            in_specs=[pl.BlockSpec(memory_space=pltpu.MemorySpace.VMEM)] * 3,
            out_specs=pl.BlockSpec(memory_space=pltpu.MemorySpace.VMEM),
            compiler_params=pltpu.CompilerParams(vmem_limit_bytes=vmem_limit),
        )(w2, q_target, q_eval)
        return out[0, 0]

    # ----- streaming path -------------------------------------------------- #
    n_pad = rows * _LANE

    def flat_rows(x):
        xf = x.reshape(-1)
        if n_pad != n:                           # only when B*A % 128 != 0
            xf = jnp.pad(xf, (0, n_pad - xf.shape[0]))
        return xf.reshape(rows, _LANE)

    # Per-element weights via one cheap repeat; padded tail gets zero weight.
    w_flat = is_weights.astype(jnp.float32).reshape(-1)
    if int(w_flat.shape[0]) == B and A > 1:
        w_flat = jnp.repeat(w_flat, A)
    assert int(w_flat.shape[0]) == n, "IS_weights must have B (or B*A) elements"

    # Block-row sizing: ~2 MiB (v5e) / ~4 MiB (v6e/v7x) per f32 stream per step,
    # multiple of 32 rows so there is no sublane padding for f32 or bf16 tiles.
    kind = jax.devices()[0].device_kind.lower()
    tile_bytes = 2 * _MIB if "v5" in kind else 4 * _MIB
    target_rows = max(_SUB, tile_bytes // (_LANE * 4) // _SUB * _SUB)
    block_rows = min(target_rows, rows // _SUB * _SUB)
    num_blocks = pl.cdiv(rows, block_rows)
    needs_mask = (rows % block_rows) != 0

    # VMEM: 2 buffers per input stream (w is f32, q tensors in native dtype)
    # plus the tiny accumulator / output; keep a safety floor and a 48 MiB cap.
    per_step = block_rows * _LANE * (4 + q_target.dtype.itemsize + q_eval.dtype.itemsize)
    vmem_limit = min(max(2 * per_step + 2 * _MIB, 16 * _MIB), 48 * _MIB)

    kernel = functools.partial(_loss_stream_kernel, inv_n=inv_n, n_rows=rows,
                               block_rows=block_rows, needs_mask=needs_mask)
    out = pl.pallas_call(
        kernel,
        out_shape=jax.ShapeDtypeStruct((1, _LANE), jnp.float32),
        grid_spec=pltpu.PrefetchScalarGridSpec(
            num_scalar_prefetch=0,
            grid=(num_blocks,),
            in_specs=[
                pl.BlockSpec((block_rows, _LANE), lambda i: (i, 0)),   # weights
                pl.BlockSpec((block_rows, _LANE), lambda i: (i, 0)),   # q_target
                pl.BlockSpec((block_rows, _LANE), lambda i: (i, 0)),   # q_eval
            ],
            out_specs=pl.BlockSpec((1, _LANE), lambda i: (0, 0)),
            scratch_shapes=[pltpu.VMEM((1, _LANE), jnp.float32)],
        ),
        compiler_params=pltpu.CompilerParams(
            dimension_semantics=("arbitrary",),
            vmem_limit_bytes=vmem_limit,
        ),
    )(flat_rows(w_flat), flat_rows(q_target), flat_rows(q_eval))
    return out[0, 0]


if __name__ == "__main__":
    key = jax.random.PRNGKey(0)
    k1, k2, k3 = jax.random.split(key, 3)

    # Fast path: shapes implied by the module (batch of transitions x n_actions).
    B, A = 8, 4
    is_weights = jax.random.uniform(k1, (B, 1), dtype=jnp.float32) + 0.5
    q_target = jax.random.normal(k2, (B, A), dtype=jnp.float32)
    q_eval = jax.random.normal(k3, (B, A), dtype=jnp.float32)
    out = jax.block_until_ready(weighted_mse_loss(is_weights, q_target, q_eval))
    ref = jnp.mean(is_weights * (q_target - q_eval) ** 2)
    assert jnp.allclose(out, ref, rtol=1e-5, atol=1e-6), (out, ref)

    # Streaming path, ragged N (flat pad + partial trailing block + row mask).
    B2, A2 = 3000, 7
    k4, k5, k6 = jax.random.split(jax.random.PRNGKey(1), 3)
    w2 = jax.random.uniform(k4, (B2, 1), dtype=jnp.float32) + 0.5
    qt2 = jax.random.normal(k5, (B2, A2), dtype=jnp.float32)
    qe2 = jax.random.normal(k6, (B2, A2), dtype=jnp.float32)
    out2 = jax.block_until_ready(weighted_mse_loss(w2, qt2, qe2, force_stream=True))
    ref2 = jnp.mean(w2 * (qt2 - qe2) ** 2)
    assert jnp.allclose(out2, ref2, rtol=1e-5, atol=1e-5), (out2, ref2)

    # Streaming path, native bf16 q tensors, N % 128 == 0 (no pad, no mask).
    B3, A3 = 4096, 4
    k7, k8, k9 = jax.random.split(jax.random.PRNGKey(2), 3)
    w3 = jax.random.uniform(k7, (B3, 1), dtype=jnp.float32) + 0.5
    qt3 = jax.random.normal(k8, (B3, A3), dtype=jnp.float32).astype(jnp.bfloat16)
    qe3 = jax.random.normal(k9, (B3, A3), dtype=jnp.float32).astype(jnp.bfloat16)
    out3 = jax.block_until_ready(weighted_mse_loss(w3, qt3, qe3, force_stream=True))
    ref3 = jnp.mean(w3 * (qt3.astype(jnp.float32) - qe3.astype(jnp.float32)) ** 2)
    assert jnp.allclose(out3, ref3, rtol=1e-4, atol=1e-5), (out3, ref3)

    print("KERNEL_OK")
</pallas_src>

<mosaic_0001>
module attributes {stable_mosaic.version = 11 : i64} {
  func.func @_loss_small_kernel(%arg0: memref<8x1xf32, #tpu.memory_space<vmem>>, %arg1: memref<8x4xf32, #tpu.memory_space<vmem>>, %arg2: memref<8x4xf32, #tpu.memory_space<vmem>>, %arg3: memref<1x128xf32, #tpu.memory_space<vmem>>) attributes {dimension_semantics = [], scalar_prefetch = 0 : i64, scratch_operands = 0 : i64, tpu.core_type = #tpu.core_type<tc>} {
    %c0 = arith.constant 0 : index
    %c0_0 = arith.constant 0 : index
    %0 = vector.load %arg1[%c0, %c0_0] : memref<8x4xf32, #tpu.memory_space<vmem>>, vector<8x4xf32>
    %c0_1 = arith.constant 0 : index
    %c0_2 = arith.constant 0 : index
    %1 = vector.load %arg2[%c0_1, %c0_2] : memref<8x4xf32, #tpu.memory_space<vmem>>, vector<8x4xf32>
    %c0_3 = arith.constant 0 : index
    %c0_4 = arith.constant 0 : index
    %2 = vector.load %arg0[%c0_3, %c0_4] : memref<8x1xf32, #tpu.memory_space<vmem>>, vector<8x1xf32>
    %3 = arith.subf %0, %1 : vector<8x4xf32>
    %4 = vector.broadcast %2 : vector<8x1xf32> to vector<8x4xf32>
    %5 = arith.mulf %4, %3 : vector<8x4xf32>
    %6 = arith.mulf %5, %3 : vector<8x4xf32>
    %cst = arith.constant dense<0.000000e+00> : vector<8xf32>
    %7 = vector.multi_reduction <add>, %6, %cst [1] : vector<8x4xf32> to vector<8xf32>
    %8 = vector.shape_cast %7 : vector<8xf32> to vector<8x1xf32>
    %cst_5 = arith.constant dense<0.000000e+00> : vector<1xf32>
    %9 = vector.multi_reduction <add>, %8, %cst_5 [0] : vector<8x1xf32> to vector<1xf32>
    %10 = vector.shape_cast %9 : vector<1xf32> to vector<1x1xf32>
    %cst_6 = arith.constant 3.125000e-02 : f32
    %11 = vector.broadcast %cst_6 : f32 to vector<1x1xf32>
    %12 = arith.mulf %10, %11 : vector<1x1xf32>
    %13 = vector.shape_cast %12 : vector<1x1xf32> to vector<1x1xf32>
    %14 = vector.broadcast %13 : vector<1x1xf32> to vector<1x128xf32>
    %c0_7 = arith.constant 0 : index
    %c0_8 = arith.constant 0 : index
    %15 = vector.load %arg3[%c0_7, %c0_8] : memref<1x128xf32, #tpu.memory_space<vmem>>, vector<1x128xf32>
    tpu.vector_store %arg3[%c0_7, %c0_8], %14 {strides = array<i32>} : memref<1x128xf32, #tpu.memory_space<vmem>>, vector<1x128xf32>,
    return
  }
}

</mosaic_0001>

<llo_original>
// kernel: tpu_custom_call.1
$region0: #{tpu_custom_call.1}
  #allocation0 [shape = 'u32[]', space=smem, size = 0x4, offset = 0x4, fixed_abs, tag = 'smem constant byte address 0x4 - core index']
  #allocation1 [shape = 'u32[144,128]{1,0:T(1,128)}', space=vmem, size = 0x12000, scoped, tag = 'internal scratch']
  %s0 = inlined_call_operand.vmem [shape: f32[8,1], index: 0, kind: input, shape index: {}]
  %s1 = inlined_call_operand.vmem [shape: f32[8,4], index: 1, kind: input, shape index: {}]
  %s2 = inlined_call_operand.vmem [shape: f32[8,4], index: 2, kind: input, shape index: {}]
  %s3 = inlined_call_operand.hbm [shape: f32[1,128], index: 3, kind: output, shape index: {}]
  %s4 = sld [smem:[#allocation0]]
  $region22: #{tpu_custom_call.1} parent=0
    _
  %s6 = ssub.s32 1, %s4
  %s7 = scalar_select 0, %s6, %s4
  $region1: #{tpu_custom_call.1} parent=0
    #allocation2 [shape = 'u8[512]{0}', space=vmem, size = 0x400, scoped, tag = 'output window, operand 0, single buffered']
    #allocation3 [shape = 's32[1]{0}', space=sflag, size = 0x4, scoped, tag = 'scoped memory for tpu_custom_call.1']
    %8 = vsyncpa [#allocation3], 0
    // Predicated region
    $region2: #{tpu_custom_call.1} parent=1 // pred_check
      _
    $region3: #{tpu_custom_call.1} parent=1 // pred_check_branch
      %10 = sbr.rel (0) target = $region5
    $region4: #{tpu_custom_call.1} parent=1 // pred_region
      _
    $region5: #{tpu_custom_call.1} parent=1 // pred_fallthru
      _
    // Predicated region
    $region6: #{tpu_custom_call.1} parent=1 // pred_check
      _
    $region7: #{tpu_custom_call.1} parent=1 // pred_check_branch
      %12 = sbr.rel (0) target = $region9
    $region8: #{tpu_custom_call.1} parent=1 // pred_region
      _
    $region9: #{tpu_custom_call.1} parent=1 // pred_fallthru
      _
    // Predicated region
    $region10: #{tpu_custom_call.1} parent=1 // pred_check
      _
    $region11: #{tpu_custom_call.1} parent=1 // pred_check_branch
      %14 = sbr.rel (0) target = $region13
    $region12: #{tpu_custom_call.1} parent=1 // pred_region
      _
    $region13: #{tpu_custom_call.1} parent=1 // pred_fallthru
      _
    %v15 = vld [vmem:[%s1] sm:$0xff]
    %v16 = vld [vmem:[%s2] sm:$0xff]
    %v17 = vld [vmem:[%s0] sm:$0xff]
    %v18 = vsub.f32 %v15, %v16
    %20 = vset.pattern.permute.xlu0 0
    %21 = vperm.xlu0 %20, %v17
    %v22 = vpop.permute.xlu0 %21
    %v24 = vmul.f32 %v22, %v18
    %v25 = vmul.f32 %v24, %v18
    %vm26 = vcmask 31744
    %v27 = vsel %vm26, %v25, 0.0
    %28 = vadd.xlane.f32.xlu0 %v27
    %v29 = vpop.xlane.xlu0 %28
    %v30 = vrot.slane %v29, 4
    %v31 = vadd.f32 %v29, %v30
    %v32 = vrot.slane %v31, 2
    %v33 = vadd.f32 %v31, %v32
    %v34 = vrot.slane %v33, 1
    %v35 = vadd.f32 %v33, %v34
    %v36 = vmul.f32 %v35, 0.03125
    %37 = vst [vmem:[#allocation2] sm:$0x1] %v36
    // Predicated region
    $region14: #{tpu_custom_call.1} parent=1 // pred_check
      _
    $region15: #{tpu_custom_call.1} parent=1 // pred_check_branch
      %39 = sbr.rel (0) target = $region17
    $region16: #{tpu_custom_call.1} parent=1 // pred_region
      %s41 = ssub.s32 16, 16
      %42 = vsyncadd [#allocation3], %s41
      %s44 = sshll.u32 [#allocation2], 4
      %s45 = int_to_ptr.vmem [resolvable:$true] %s44
      %47 = dma.vmem_to_hbm [thread:$0]  %s45, 16, %s3, [#allocation3]
    $region17: #{tpu_custom_call.1} parent=1 // pred_fallthru
      _
    // Predicated region
    $region18: #{tpu_custom_call.1} parent=1 // pred_check
      _
    $region19: #{tpu_custom_call.1} parent=1 // pred_check_branch
      %49 = sbr.rel (0) target = $region21
    $region20: #{tpu_custom_call.1} parent=1 // pred_region
      %50 = dma.done [#allocation3], 16
    $region21: #{tpu_custom_call.1} parent=1 // pred_fallthru
      _
    %51 = vsyncpa [#allocation3], 1

</llo_original>
